<compile_context>
chip_gen: v6e
topology: v6e:2x2x1
jax: 0.10.0
libtpu: 0.0.40
codegen_flags: <defaults>
</compile_context>

<pallas_src>
import jax
import jax.numpy as jnp
from jax.experimental import pallas as pl
from jax.experimental.pallas import tpu as pltpu

_TILE_BYTES = 4 * 1024 * 1024          # target tile size (2-4 MiB ≈ HBM roofline bucket)
_VMEM_LIMIT_BYTES = 32 * 1024 * 1024   # 2 arrays x 2 buffers x 4 MiB fits on every gen
_LANE_COL_CHOICES = (1024, 512, 256, 128)  # lane-dense widths (multiples of 128)
_FALLBACK_BLOCK_BYTES = 512 * 1024     # 1-D fallback tile (rare non-128-divisible numel)


def _lambda_tanh_kernel(x_ref, o_ref):
    # Elementwise fn(x) = tanh(x); EUP transcendental over the whole tile.
    o_ref[...] = jnp.tanh(x_ref[...])


def lambda_layer_tanh(x, *, donate_input=False):
    """LambdaLayer(fn=tanh) forward for an arbitrary-shape input (e.g. NCHW)."""
    orig_shape = x.shape
    n_total = x.size
    itemsize = jnp.dtype(x.dtype).itemsize
    x_flat = x.reshape(-1)  # free (bitcast) under jit; no pad / no data copy

    compiler_params = pltpu.CompilerParams(
        dimension_semantics=("parallel",),   # v7x megacore; neutral on v5e/v6e
        vmem_limit_bytes=_VMEM_LIMIT_BYTES,
    )
    cost = pl.CostEstimate(
        flops=0,
        transcendentals=n_total,
        bytes_accessed=2 * n_total * itemsize,
    )
    io_alias = {0: 0} if donate_input else {}

    cols = next((c for c in _LANE_COL_CHOICES if n_total % c == 0), None)

    if cols is not None:
        # Lane-dense 2-D path: full unmasked lane stores, no pad, no slice.
        rows = n_total // cols
        block_rows = _TILE_BYTES // (cols * itemsize)  # dtype-scaled -> ~4 MiB tiles
        if block_rows >= rows:
            block_rows = rows  # full-extent block: exempt from the (8,128) rule
        x2d = x_flat.reshape(rows, cols)
        out2d = pl.pallas_call(
            _lambda_tanh_kernel,
            out_shape=jax.ShapeDtypeStruct((rows, cols), x.dtype),
            grid=(pl.cdiv(rows, block_rows),),  # final row-block may be partial (masked)
            in_specs=[pl.BlockSpec((block_rows, cols), lambda i: (i, 0))],
            out_specs=pl.BlockSpec((block_rows, cols), lambda i: (i, 0)),
            input_output_aliases=io_alias,
            compiler_params=compiler_params,
            cost_estimate=cost,
        )(x2d)
        return out2d.reshape(orig_shape)

    # Fallback (numel not a multiple of 128): tile the flat 1-D array directly.
    # The final partial block reads undefined padding lanes and its OOB writes
    # are masked — safe for a pure elementwise op only (never for reductions).
    block_elems = _FALLBACK_BLOCK_BYTES // itemsize  # multiple of 128 for 1/2/4/8-byte dtypes
    if block_elems >= n_total:
        block_elems = n_total  # full-extent block: exempt from the lane rule
    out_flat = pl.pallas_call(
        _lambda_tanh_kernel,
        out_shape=jax.ShapeDtypeStruct((n_total,), x.dtype),
        grid=(pl.cdiv(n_total, block_elems),),
        in_specs=[pl.BlockSpec((block_elems,), lambda i: (i,))],
        out_specs=pl.BlockSpec((block_elems,), lambda i: (i,)),
        input_output_aliases=io_alias,
        compiler_params=compiler_params,
        cost_estimate=cost,
    )(x_flat)
    return out_flat.reshape(orig_shape)


if __name__ == "__main__":
    key = jax.random.PRNGKey(0)
    k1, k2, k3, k4 = jax.random.split(key, 4)

    # Primary check: small NCHW feature map (lane-dense 2-D path, single tile).
    x1 = jax.random.normal(k1, (2, 4, 16, 16), dtype=jnp.float32)
    ref1 = jnp.tanh(x1)
    out1 = jax.block_until_ready(lambda_layer_tanh(x1))
    assert out1.shape == x1.shape and out1.dtype == x1.dtype
    assert jnp.allclose(out1, ref1, atol=1e-5, rtol=1e-5)

    # Non-128-divisible numel (1-D full-extent fallback, no padding copies).
    x2 = jax.random.normal(k2, (2, 3, 14, 14), dtype=jnp.float32)
    ref2 = jnp.tanh(x2)
    out2 = jax.block_until_ready(lambda_layer_tanh(x2))
    assert jnp.allclose(out2, ref2, atol=1e-5, rtol=1e-5)

    # Multi-tile 2-D grid path (rows > block_rows -> pipelined grid of 2).
    x3 = jax.random.normal(k3, (8, 16, 128, 128), dtype=jnp.float32)
    ref3 = jnp.tanh(x3)
    out3 = jax.block_until_ready(lambda_layer_tanh(x3))
    assert jnp.allclose(out3, ref3, atol=1e-5, rtol=1e-5)

    # Large non-128-divisible numel (1-D tiled path with partial final block).
    x4 = jax.random.normal(k4, (3, 7, 100, 100), dtype=jnp.float32)
    ref4 = jnp.tanh(x4)
    out4 = jax.block_until_ready(lambda_layer_tanh(x4))
    assert jnp.allclose(out4, ref4, atol=1e-5, rtol=1e-5)

    print("KERNEL_OK")
</pallas_src>

<mosaic_0001>
module attributes {stable_mosaic.version = 11 : i64} {
  func.func @_lambda_tanh_kernel(%arg0: i32, %arg1: memref<2x1024xf32, #tpu.memory_space<vmem>>, %arg2: memref<2x1024xf32, #tpu.memory_space<vmem>>) attributes {dimension_semantics = [#tpu.dimension_semantics<parallel>], iteration_bounds = array<i64: 1>, scalar_prefetch = 0 : i64, scratch_operands = 0 : i64, tpu.core_type = #tpu.core_type<tc>, window_params = [{transform_indices = @transform_0, window_bounds = array<i64: 2, 1024>}, {transform_indices = @transform_1, window_bounds = array<i64: 2, 1024>}]} {
    %c0 = arith.constant 0 : index
    %c0_0 = arith.constant 0 : index
    %0 = vector.load %arg1[%c0, %c0_0] : memref<2x1024xf32, #tpu.memory_space<vmem>>, vector<2x1024xf32>
    %1 = math.tanh %0 : vector<2x1024xf32>
    %c0_1 = arith.constant 0 : index
    %c0_2 = arith.constant 0 : index
    %2 = vector.load %arg2[%c0_1, %c0_2] : memref<2x1024xf32, #tpu.memory_space<vmem>>, vector<2x1024xf32>
    tpu.vector_store %arg2[%c0_1, %c0_2], %1 {strides = array<i32>} : memref<2x1024xf32, #tpu.memory_space<vmem>>, vector<2x1024xf32>,
    return
  }
  func.func @transform_0(%arg0: i32) -> (i32, i32) {
    %c0_i32 = arith.constant 0 : i32
    %c0_i32_0 = arith.constant 0 : i32
    return %arg0, %c0_i32 : i32, i32
  }
  func.func @transform_1(%arg0: i32) -> (i32, i32) {
    %c0_i32 = arith.constant 0 : i32
    %c0_i32_0 = arith.constant 0 : i32
    return %arg0, %c0_i32 : i32, i32
  }
}

</mosaic_0001>

<llo_original>
// kernel: tpu_custom_call.1
$region0: #{tpu_custom_call.1}
  #allocation0 [shape = 'u32[]', space=smem, size = 0x4, offset = 0x4, fixed_abs, tag = 'smem constant byte address 0x4 - core index']
  #allocation1 [shape = 'u32[144,128]{1,0:T(1,128)}', space=vmem, size = 0x12000, scoped, tag = 'internal scratch']
  %s0 = inlined_call_operand.hbm [shape: f32[2,1024], index: 0, kind: input, shape index: {}]
  %s1 = inlined_call_operand.hbm [shape: f32[2,1024], index: 1, kind: output, shape index: {}]
  %s2 = sld [smem:[#allocation0]]
  $region18: #{tpu_custom_call.1} parent=0
    _
  %s4 = ssub.s32 1, %s2
  %s5 = scalar_select 0, %s4, %s2
  $region1: #{tpu_custom_call.1} parent=0
    #allocation2 [shape = 'u8[8192]{0}', space=vmem, size = 0x2000, scoped, tag = 'input window, operand 0, single buffered']
    #allocation3 [shape = 's32[1]{0}', space=sflag, size = 0x4, scoped, tag = 'scoped memory for tpu_custom_call.1']
    #allocation4 [shape = 's32[1]{0}', space=sflag, size = 0x4, scoped, tag = 'scoped memory for tpu_custom_call.1']
    #allocation5 [shape = 'u8[8192]{0}', space=vmem, size = 0x2000, scoped, tag = 'output window, operand 0, single buffered']
    %6 = vsyncpa [#allocation3], 0
    %7 = vsyncpa [#allocation4], 0
    // Predicated region
    $region2: #{tpu_custom_call.1} parent=1 // pred_check
      _
    $region3: #{tpu_custom_call.1} parent=1 // pred_check_branch
      %9 = sbr.rel (0) target = $region5
    $region4: #{tpu_custom_call.1} parent=1 // pred_region
      %s11 = ssub.s32 256, 256
      %12 = vsyncadd [#allocation3], %s11
      %s14 = sshll.u32 [#allocation2], 4
      %s15 = int_to_ptr.vmem [resolvable:$true] %s14
      %17 = dma.hbm_to_vmem [thread:$0]  %s0, 256, %s15, [#allocation3]
    $region5: #{tpu_custom_call.1} parent=1 // pred_fallthru
      _
    // Predicated region
    $region6: #{tpu_custom_call.1} parent=1 // pred_check
      _
    $region7: #{tpu_custom_call.1} parent=1 // pred_check_branch
      %19 = sbr.rel (0) target = $region9
    $region8: #{tpu_custom_call.1} parent=1 // pred_region
      %20 = dma.done [#allocation3], 256
    $region9: #{tpu_custom_call.1} parent=1 // pred_fallthru
      _
    %v21 = vld [vmem:[#allocation2] sm:$0xff]
    %v22 = vld [vmem:[#allocation2 + $0x8] sm:$0xff]
    %v23 = vtanh.pop %v21
    %v24 = vtanh.pop %v22
    %25 = vst [vmem:[#allocation5] sm:$0xff] %v23
    %26 = vst [vmem:[#allocation5 + $0x8] sm:$0xff] %v24
    // Predicated region
    $region10: #{tpu_custom_call.1} parent=1 // pred_check
      _
    $region11: #{tpu_custom_call.1} parent=1 // pred_check_branch
      %28 = sbr.rel (0) target = $region13
    $region12: #{tpu_custom_call.1} parent=1 // pred_region
      %s30 = ssub.s32 256, 256
      %31 = vsyncadd [#allocation4], %s30
      %s33 = sshll.u32 [#allocation5], 4
      %s34 = int_to_ptr.vmem [resolvable:$true] %s33
      %36 = dma.vmem_to_hbm [thread:$0]  %s34, 256, %s1, [#allocation4]
    $region13: #{tpu_custom_call.1} parent=1 // pred_fallthru
      _
    // Predicated region
    $region14: #{tpu_custom_call.1} parent=1 // pred_check
      _
    $region15: #{tpu_custom_call.1} parent=1 // pred_check_branch
      %38 = sbr.rel (0) target = $region17
    $region16: #{tpu_custom_call.1} parent=1 // pred_region
      %39 = dma.done [#allocation4], 256
    $region17: #{tpu_custom_call.1} parent=1 // pred_fallthru
      _
    %40 = vsyncpa [#allocation3], 1
    %41 = vsyncpa [#allocation4], 1

</llo_original>
